<compile_context>
chip_gen: v7x
topology: tpu7x:2x2x1
jax: 0.10.0
libtpu: 0.0.40
codegen_flags: <defaults>
</compile_context>

<pallas_src>
import jax
import jax.numpy as jnp
from jax.experimental import pallas as pl
from jax.experimental.pallas import tpu as pltpu

SUBLANE = 8  # f32 sublane quantum


def _round_up(x, m):
    return -(-x // m) * m


def _num_tensorcores():
    """Best-effort TensorCore-per-chip count (2 on v7x/v4 megacore, else 1)."""
    try:
        kind = jax.devices()[0].device_kind.lower()
    except Exception:
        return 1
    if "v7" in kind or "v4" in kind:
        return 2
    return 1


def resblock_kernel(x_ref, w1_ref, b1_ref, w2_ref, b2_ref, w3_ref, b3_ref, o_ref):
    x = x_ref[...]
    # Linear 1 + ReLU
    h = jnp.dot(x, w1_ref[...], preferred_element_type=jnp.float32) + b1_ref[...]
    h = jnp.maximum(h, 0.0)
    # Linear 2 + ReLU
    h = jnp.dot(h, w2_ref[...], preferred_element_type=jnp.float32) + b2_ref[...]
    h = jnp.maximum(h, 0.0)
    # Linear 3
    h = jnp.dot(h, w3_ref[...], preferred_element_type=jnp.float32) + b3_ref[...]
    # Residual add
    o_ref[...] = (h + x.astype(jnp.float32)).astype(o_ref.dtype)


def residual_block(x, w1, b1, w2, b2, w3, b3, *, bm=2048):
    """Fused residual MLP block. x: [B, in_dim]; weights as [in, out]; biases 1-D or [1, out]."""
    B, in_dim = x.shape
    hidden = w1.shape[1]

    # Accept PyTorch-style 1-D biases.
    b1 = jnp.asarray(b1).reshape(1, hidden)
    b2 = jnp.asarray(b2).reshape(1, hidden)
    b3 = jnp.asarray(b3).reshape(1, in_dim)

    # --- batch tiling: balanced, 8-row-aligned tiles; >=2 steps on 2-TC chips ---
    B8 = _round_up(B, SUBLANE)
    n = pl.cdiv(B8, bm)
    n_tc = _num_tensorcores()
    if n_tc >= 2 and B8 > SUBLANE * n_tc:
        n = max(n, n_tc)  # shard the "parallel" batch axis across both TensorCores
    bm_eff = _round_up(pl.cdiv(B8, n), SUBLANE)
    Bp = n * bm_eff

    # Only the batch tail is zero-padded (sliced off below); features stay unpadded.
    xp = jnp.pad(x, ((0, Bp - B), (0, 0))) if Bp != B else x

    # Weights/biases are tiny and block-index-invariant: full-array-dim blocks.
    full = lambda shape: pl.BlockSpec(shape, lambda i: (0, 0))

    out = pl.pallas_call(
        resblock_kernel,
        out_shape=jax.ShapeDtypeStruct((Bp, in_dim), x.dtype),
        grid_spec=pltpu.PrefetchScalarGridSpec(
            num_scalar_prefetch=0,
            grid=(n,),
            in_specs=[
                pl.BlockSpec((bm_eff, in_dim), lambda i: (i, 0)),  # x tile (unpadded lanes)
                full((in_dim, hidden)),   # W1
                full((1, hidden)),        # b1
                full((hidden, hidden)),   # W2
                full((1, hidden)),        # b2
                full((hidden, in_dim)),   # W3
                full((1, in_dim)),        # b3
            ],
            out_specs=pl.BlockSpec((bm_eff, in_dim), lambda i: (i, 0)),
        ),
        compiler_params=pltpu.CompilerParams(
            dimension_semantics=("parallel",)
        ),
    )(xp, w1, b1, w2, b2, w3, b3)

    # Strip batch-tail padding.
    return out[:B] if Bp != B else out


def reference(x, w1, b1, w2, b2, w3, b3):
    h = jnp.maximum(x @ w1 + b1.reshape(1, -1), 0.0)
    h = jnp.maximum(h @ w2 + b2.reshape(1, -1), 0.0)
    h = h @ w3 + b3.reshape(1, -1)
    return h + x


if __name__ == "__main__":
    key = jax.random.PRNGKey(0)
    B, in_dim, hidden = 19, 32, 64  # non-multiple-of-8 batch exercises tail padding

    k = jax.random.split(key, 7)
    x = jax.random.normal(k[0], (B, in_dim), dtype=jnp.float32)
    # Deterministic synthetic parameter init (scaled normals), shapes match nn.Linear
    # with W stored as [in, out] (= W_pt.T) and PyTorch-style 1-D biases.
    w1 = jax.random.normal(k[1], (in_dim, hidden), dtype=jnp.float32) * 0.1
    b1 = jax.random.normal(k[2], (hidden,), dtype=jnp.float32) * 0.01
    w2 = jax.random.normal(k[3], (hidden, hidden), dtype=jnp.float32) * 0.1
    b2 = jax.random.normal(k[4], (hidden,), dtype=jnp.float32) * 0.01
    w3 = jax.random.normal(k[5], (hidden, in_dim), dtype=jnp.float32) * 0.1
    b3 = jax.random.normal(k[6], (in_dim,), dtype=jnp.float32) * 0.01

    out = residual_block(x, w1, b1, w2, b2, w3, b3)
    out = jax.block_until_ready(out)

    ref = reference(x, w1, b1, w2, b2, w3, b3)
    assert out.shape == (B, in_dim)
    assert jnp.allclose(out, ref, atol=1e-5, rtol=1e-5)

    print("KERNEL_OK")
</pallas_src>

<mosaic_0001>
module attributes {stable_mosaic.version = 11 : i64} {
  func.func @resblock_kernel(%arg0: i32, %arg1: memref<24x32xf32, #tpu.memory_space<vmem>>, %arg2: memref<32x64xf32, #tpu.memory_space<vmem>>, %arg3: memref<1x64xf32, #tpu.memory_space<vmem>>, %arg4: memref<64x64xf32, #tpu.memory_space<vmem>>, %arg5: memref<1x64xf32, #tpu.memory_space<vmem>>, %arg6: memref<64x32xf32, #tpu.memory_space<vmem>>, %arg7: memref<1x32xf32, #tpu.memory_space<vmem>>, %arg8: memref<24x32xf32, #tpu.memory_space<vmem>>) attributes {dimension_semantics = [#tpu.dimension_semantics<parallel>], iteration_bounds = array<i64: 1>, scalar_prefetch = 0 : i64, scratch_operands = 0 : i64, tpu.core_type = #tpu.core_type<tc>, window_params = [{transform_indices = @transform_0, window_bounds = array<i64: 24, 32>}, {pipeline_mode = #tpu.pipeline_mode<synchronous>, transform_indices = @transform_1, window_bounds = array<i64: 32, 64>}, {pipeline_mode = #tpu.pipeline_mode<synchronous>, transform_indices = @transform_2, window_bounds = array<i64: 1, 64>}, {pipeline_mode = #tpu.pipeline_mode<synchronous>, transform_indices = @transform_3, window_bounds = array<i64: 64, 64>}, {pipeline_mode = #tpu.pipeline_mode<synchronous>, transform_indices = @transform_4, window_bounds = array<i64: 1, 64>}, {pipeline_mode = #tpu.pipeline_mode<synchronous>, transform_indices = @transform_5, window_bounds = array<i64: 64, 32>}, {pipeline_mode = #tpu.pipeline_mode<synchronous>, transform_indices = @transform_6, window_bounds = array<i64: 1, 32>}, {transform_indices = @transform_7, window_bounds = array<i64: 24, 32>}]} {
    %c0 = arith.constant 0 : index
    %c0_0 = arith.constant 0 : index
    %0 = vector.load %arg1[%c0, %c0_0] : memref<24x32xf32, #tpu.memory_space<vmem>>, vector<24x32xf32>
    %c0_1 = arith.constant 0 : index
    %c0_2 = arith.constant 0 : index
    %1 = vector.load %arg2[%c0_1, %c0_2] : memref<32x64xf32, #tpu.memory_space<vmem>>, vector<32x64xf32>
    %cst = arith.constant dense<0.000000e+00> : vector<24x64xf32>
    %2 = tpu.matmul %0, %1, %cst {dimension_numbers = #tpu.dot_dimension_numbers<[1], [0], [0], [1], [0, 0, 1, 1], [], []>} : vector<24x32xf32>, vector<32x64xf32>, vector<24x64xf32> -> vector<24x64xf32>
    %c0_3 = arith.constant 0 : index
    %c0_4 = arith.constant 0 : index
    %3 = vector.load %arg3[%c0_3, %c0_4] : memref<1x64xf32, #tpu.memory_space<vmem>>, vector<1x64xf32>
    %4 = vector.broadcast %3 : vector<1x64xf32> to vector<24x64xf32>
    %5 = arith.addf %2, %4 : vector<24x64xf32>
    %cst_5 = arith.constant 0.000000e+00 : f32
    %6 = vector.broadcast %cst_5 : f32 to vector<24x64xf32>
    %7 = arith.maximumf %5, %6 : vector<24x64xf32>
    %c0_6 = arith.constant 0 : index
    %c0_7 = arith.constant 0 : index
    %8 = vector.load %arg4[%c0_6, %c0_7] : memref<64x64xf32, #tpu.memory_space<vmem>>, vector<64x64xf32>
    %cst_8 = arith.constant dense<0.000000e+00> : vector<24x64xf32>
    %9 = tpu.matmul %7, %8, %cst_8 {dimension_numbers = #tpu.dot_dimension_numbers<[1], [0], [0], [1], [0, 0, 1, 1], [], []>} : vector<24x64xf32>, vector<64x64xf32>, vector<24x64xf32> -> vector<24x64xf32>
    %c0_9 = arith.constant 0 : index
    %c0_10 = arith.constant 0 : index
    %10 = vector.load %arg5[%c0_9, %c0_10] : memref<1x64xf32, #tpu.memory_space<vmem>>, vector<1x64xf32>
    %11 = vector.broadcast %10 : vector<1x64xf32> to vector<24x64xf32>
    %12 = arith.addf %9, %11 : vector<24x64xf32>
    %cst_11 = arith.constant 0.000000e+00 : f32
    %13 = vector.broadcast %cst_11 : f32 to vector<24x64xf32>
    %14 = arith.maximumf %12, %13 : vector<24x64xf32>
    %c0_12 = arith.constant 0 : index
    %c0_13 = arith.constant 0 : index
    %15 = vector.load %arg6[%c0_12, %c0_13] : memref<64x32xf32, #tpu.memory_space<vmem>>, vector<64x32xf32>
    %cst_14 = arith.constant dense<0.000000e+00> : vector<24x32xf32>
    %16 = tpu.matmul %14, %15, %cst_14 {dimension_numbers = #tpu.dot_dimension_numbers<[1], [0], [0], [1], [0, 0, 1, 1], [], []>} : vector<24x64xf32>, vector<64x32xf32>, vector<24x32xf32> -> vector<24x32xf32>
    %c0_15 = arith.constant 0 : index
    %c0_16 = arith.constant 0 : index
    %17 = vector.load %arg7[%c0_15, %c0_16] : memref<1x32xf32, #tpu.memory_space<vmem>>, vector<1x32xf32>
    %18 = vector.broadcast %17 : vector<1x32xf32> to vector<24x32xf32>
    %19 = arith.addf %16, %18 : vector<24x32xf32>
    %20 = arith.addf %19, %0 : vector<24x32xf32>
    %c0_17 = arith.constant 0 : index
    %c0_18 = arith.constant 0 : index
    %21 = vector.load %arg8[%c0_17, %c0_18] : memref<24x32xf32, #tpu.memory_space<vmem>>, vector<24x32xf32>
    tpu.vector_store %arg8[%c0_17, %c0_18], %20 {strides = array<i32>} : memref<24x32xf32, #tpu.memory_space<vmem>>, vector<24x32xf32>,
    return
  }
  func.func @transform_0(%arg0: i32) -> (i32, i32) {
    %c0_i32 = arith.constant 0 : i32
    %c0_i32_0 = arith.constant 0 : i32
    return %arg0, %c0_i32 : i32, i32
  }
  func.func @transform_1(%arg0: i32) -> (i32, i32) {
    %c0_i32 = arith.constant 0 : i32
    %c0_i32_0 = arith.constant 0 : i32
    %c0_i32_1 = arith.constant 0 : i32
    return %c0_i32, %c0_i32_0 : i32, i32
  }
  func.func @transform_2(%arg0: i32) -> (i32, i32) {
    %c0_i32 = arith.constant 0 : i32
    %c0_i32_0 = arith.constant 0 : i32
    %c0_i32_1 = arith.constant 0 : i32
    return %c0_i32, %c0_i32_0 : i32, i32
  }
  func.func @transform_3(%arg0: i32) -> (i32, i32) {
    %c0_i32 = arith.constant 0 : i32
    %c0_i32_0 = arith.constant 0 : i32
    %c0_i32_1 = arith.constant 0 : i32
    return %c0_i32, %c0_i32_0 : i32, i32
  }
  func.func @transform_4(%arg0: i32) -> (i32, i32) {
    %c0_i32 = arith.constant 0 : i32
    %c0_i32_0 = arith.constant 0 : i32
    %c0_i32_1 = arith.constant 0 : i32
    return %c0_i32, %c0_i32_0 : i32, i32
  }
  func.func @transform_5(%arg0: i32) -> (i32, i32) {
    %c0_i32 = arith.constant 0 : i32
    %c0_i32_0 = arith.constant 0 : i32
    %c0_i32_1 = arith.constant 0 : i32
    return %c0_i32, %c0_i32_0 : i32, i32
  }
  func.func @transform_6(%arg0: i32) -> (i32, i32) {
    %c0_i32 = arith.constant 0 : i32
    %c0_i32_0 = arith.constant 0 : i32
    %c0_i32_1 = arith.constant 0 : i32
    return %c0_i32, %c0_i32_0 : i32, i32
  }
  func.func @transform_7(%arg0: i32) -> (i32, i32) {
    %c0_i32 = arith.constant 0 : i32
    %c0_i32_0 = arith.constant 0 : i32
    return %arg0, %c0_i32 : i32, i32
  }
}

</mosaic_0001>

<llo_original>
// kernel: tpu_custom_call.1
$region0: #{tpu_custom_call.1}
  #allocation0 [shape = 'u32[]', space=smem, size = 0x4, offset = 0x4, fixed_abs, tag = 'smem constant byte address 0x4 - core index']
  #allocation1 [shape = 'u32[144,128]{1,0:T(1,128)}', space=vmem, size = 0x12000, scoped, tag = 'internal scratch']
  %s0 = inlined_call_operand.hbm [shape: f32[24,32], index: 0, kind: input, shape index: {}]
  %s1 = inlined_call_operand.vmem [shape: f32[32,64], index: 1, kind: input, shape index: {}]
  %s2 = inlined_call_operand.vmem [shape: f32[1,64], index: 2, kind: input, shape index: {}]
  %s3 = inlined_call_operand.vmem [shape: f32[64,64], index: 3, kind: input, shape index: {}]
  %s4 = inlined_call_operand.vmem [shape: f32[1,64], index: 4, kind: input, shape index: {}]
  %s5 = inlined_call_operand.vmem [shape: f32[64,32], index: 5, kind: input, shape index: {}]
  %s6 = inlined_call_operand.vmem [shape: f32[1,32], index: 6, kind: input, shape index: {}]
  %s7 = inlined_call_operand.hbm [shape: f32[24,32], index: 7, kind: output, shape index: {}]
  %s8 = sld [smem:[#allocation0]]
  $region42: #{tpu_custom_call.1} parent=0
    _
  %s10 = ssub.s32 1, %s8
  %s11 = scalar_select 0, %s10, %s8
  $region1: #{tpu_custom_call.1} parent=0
    #allocation2 [shape = 'u8[12288]{0}', space=vmem, size = 0x3000, scoped, tag = 'input window, operand 0, single buffered']
    #allocation3 [shape = 's32[1]{0}', space=sflag, size = 0x4, scoped, tag = 'scoped memory for tpu_custom_call.1']
    #allocation4 [shape = 's32[1]{0}', space=sflag, size = 0x4, scoped, tag = 'scoped memory for tpu_custom_call.1']
    #allocation5 [shape = 'u8[12288]{0}', space=vmem, size = 0x3000, scoped, tag = 'output window, operand 0, single buffered']
    %12 = vsyncpa [#allocation3], 0
    %13 = vsyncpa [#allocation4], 0
    // Predicated region
    $region2: #{tpu_custom_call.1} parent=1 // pred_check
      _
    $region3: #{tpu_custom_call.1} parent=1 // pred_check_branch
      %15 = sbr.rel (0) target = $region5
    $region4: #{tpu_custom_call.1} parent=1 // pred_region
      %s17 = ssub.s32 384, 384
      %18 = vsyncadd [#allocation3], %s17
      %s19 = sshll.u32 [#allocation2], 4
      %s20 = int_to_ptr.vmem [resolvable:$true] %s19
      %25 = dma.hbm_to_vmem [thread:$0]  %s0, 384, %s20, [#allocation3], 128, 128, 8
    $region5: #{tpu_custom_call.1} parent=1 // pred_fallthru
      _
    // Predicated region
    $region6: #{tpu_custom_call.1} parent=1 // pred_check
      _
    $region7: #{tpu_custom_call.1} parent=1 // pred_check_branch
      %27 = sbr.rel (0) target = $region9
    $region8: #{tpu_custom_call.1} parent=1 // pred_region
      _
    $region9: #{tpu_custom_call.1} parent=1 // pred_fallthru
      _
    // Predicated region
    $region10: #{tpu_custom_call.1} parent=1 // pred_check
      _
    $region11: #{tpu_custom_call.1} parent=1 // pred_check_branch
      %29 = sbr.rel (0) target = $region13
    $region12: #{tpu_custom_call.1} parent=1 // pred_region
      _
    $region13: #{tpu_custom_call.1} parent=1 // pred_fallthru
      _
    // Predicated region
    $region14: #{tpu_custom_call.1} parent=1 // pred_check
      _
    $region15: #{tpu_custom_call.1} parent=1 // pred_check_branch
      %31 = sbr.rel (0) target = $region17
    $region16: #{tpu_custom_call.1} parent=1 // pred_region
      _
    $region17: #{tpu_custom_call.1} parent=1 // pred_fallthru
      _
    // Predicated region
    $region18: #{tpu_custom_call.1} parent=1 // pred_check
      _
    $region19: #{tpu_custom_call.1} parent=1 // pred_check_branch
      %33 = sbr.rel (0) target = $region21
    $region20: #{tpu_custom_call.1} parent=1 // pred_region
      _
    $region21: #{tpu_custom_call.1} parent=1 // pred_fallthru
      _
    // Predicated region
    $region22: #{tpu_custom_call.1} parent=1 // pred_check
      _
    $region23: #{tpu_custom_call.1} parent=1 // pred_check_branch
      %35 = sbr.rel (0) target = $region25
    $region24: #{tpu_custom_call.1} parent=1 // pred_region
      _
    $region25: #{tpu_custom_call.1} parent=1 // pred_fallthru
      _
    // Predicated region
    $region26: #{tpu_custom_call.1} parent=1 // pred_check
      _
    $region27: #{tpu_custom_call.1} parent=1 // pred_check_branch
      %37 = sbr.rel (0) target = $region29
    $region28: #{tpu_custom_call.1} parent=1 // pred_region
      _
    $region29: #{tpu_custom_call.1} parent=1 // pred_fallthru
      _
    // Predicated region
    $region30: #{tpu_custom_call.1} parent=1 // pred_check
      _
    $region31: #{tpu_custom_call.1} parent=1 // pred_check_branch
      %39 = sbr.rel (0) target = $region33
    $region32: #{tpu_custom_call.1} parent=1 // pred_region
      %40 = dma.done [#allocation3], 384
    $region33: #{tpu_custom_call.1} parent=1 // pred_fallthru
      _
    %v41 = vld [vmem:[#allocation2] sm:$0xff]
    %v42 = vld [vmem:[#allocation2 + $0x8] sm:$0xff]
    %v43 = vld [vmem:[#allocation2 + $0x10] sm:$0xff]
    %v44 = vld [vmem:[%s1] sm:$0xff]
    %v45 = vld [vmem:[%s1 + $0x8] sm:$0xff]
    %v46 = vld [vmem:[%s1 + $0x10] sm:$0xff]
    %v47 = vld [vmem:[%s1 + $0x18] sm:$0xff]
    %v48 = vld [vmem:[%s2] sm:$0x1]
    %v50 = vlaneseq
    %v51 = vshrl.u32 %v50, 7
    %v52 = vsub.s32 0, %v51
    %v53 = vrot.slane %v48, %v52
    %vm55 = vcmask 261120
    %v57 = vsel %vm55, %v41, 0
    %v60 = vsel %vm55, %v42, 0
    %v63 = vsel %vm55, %v43, 0
    %65 = vmatprep.subr.mxu0 0.0
    %66 = vmatpush1.msra.mxu0 %v44
    %67 = vmatprep.subr.mxu0 0.0
    %68 = vmatpush1.msra.mxu0 %v45
    %69 = vmatprep.subr.mxu0 0.0
    %70 = vmatpush1.msra.mxu0 %v46
    %71 = vmatprep.subr.mxu0 0.0
    %72 = vmatpush1.msra.mxu0 %v47
    %73 = vmatprep.subr.mxu0 0.0
    %74 = vmatpush1.msra.mxu0 0.0
    %75 = vmatprep.subr.mxu0 0.0
    %76 = vmatpush1.msra.mxu0 0.0
    %77 = vmatprep.subr.mxu0 0.0
    %78 = vmatpush1.msra.mxu0 0.0
    %79 = vmatprep.subr.mxu0 0.0
    %80 = vmatpush1.msra.mxu0 0.0
    %81 = vmatprep.subr.mxu0 0.0
    %82 = vmatpush1.msra.mxu0 0.0
    %83 = vmatprep.subr.mxu0 0.0
    %84 = vmatpush1.msra.mxu0 0.0
    %85 = vmatprep.subr.mxu0 0.0
    %86 = vmatpush1.msra.mxu0 0.0
    %87 = vmatprep.subr.mxu0 0.0
    %88 = vmatpush1.msra.mxu0 0.0
    %89 = vmatprep.subr.mxu0 0.0
    %90 = vmatpush1.msra.mxu0 0.0
    %91 = vmatprep.subr.mxu0 0.0
    %92 = vmatpush1.msra.mxu0 0.0
    %93 = vmatprep.subr.mxu0 0.0
    %94 = vmatpush1.msra.mxu0 0.0
    %95 = vmatprep.subr.mxu0 0.0
    %96 = vmatpush1.msra.mxu0 0.0
    %97 = vmatprep.subr.mxu0 0.0
    %98 = vmatpush1.msra.mxu0 0.0
    %99 = vmatprep.subr.mxu0 0.0
    %100 = vmatpush1.msra.mxu0 0.0
    %101 = vmatprep.subr.mxu0 0.0
    %102 = vmatpush1.msra.mxu0 0.0
    %103 = vmatprep.subr.mxu0 0.0
    %104 = vmatpush1.msra.mxu0 0.0
    %105 = vmatprep.subr.mxu0 0.0
    %106 = vmatpush1.msra.mxu0 0.0
    %107 = vmatprep.subr.mxu0 0.0
    %108 = vmatpush1.msra.mxu0 0.0
    %109 = vmatprep.subr.mxu0 0.0
    %110 = vmatpush1.msra.mxu0 0.0
    %111 = vmatprep.subr.mxu0 0.0
    %112 = vmatpush1.msra.mxu0 0.0
    %113 = vmatprep.subr.mxu0 0.0
    %114 = vmatpush1.msra.mxu0 0.0
    %115 = vmatprep.subr.mxu0 0.0
    %116 = vmatpush1.msra.mxu0 0.0
    %117 = vmatprep.subr.mxu0 0.0
    %118 = vmatpush1.msra.mxu0 0.0
    %119 = vmatprep.subr.mxu0 0.0
    %120 = vmatpush1.msra.mxu0 0.0
    %121 = vmatprep.subr.mxu0 0.0
    %122 = vmatpush1.msra.mxu0 0.0
    %123 = vmatprep.subr.mxu0 0.0
    %124 = vmatpush1.msra.mxu0 0.0
    %125 = vmatprep.subr.mxu0 0.0
    %126 = vmatpush1.msra.mxu0 0.0
    %127 = vmatprep.subr.mxu0 0.0
    %128 = vmatpush1.msra.mxu0 0.0
    %129 = vmatprep.mubr.f32.mxu0 0.0
    %130 = vmatmul.mubr.f32.gmra.mrb[0].mxu0 %v57
    %v131 = vpop.f32.mrb[0].mxu0
    %v132 = vadd.f32 %v53, %v131
    %v133 = vpop.f32.mrb[0].mxu0
    %134 = vmatprep.mubr.f32.mxu0 0.0
    %135 = vmatmul.mubr.f32.gmra.mrb[0].mxu0 %v60
    %v136 = vpop.f32.mrb[0].mxu0
    %v137 = vadd.f32 %v53, %v136
    %v138 = vpop.f32.mrb[0].mxu0
    %139 = vmatprep.mubr.f32.mxu0 0.0
    %140 = vmatmul.mubr.f32.gmra.mrb[0].mxu0 %v63
    %v141 = vpop.f32.mrb[0].mxu0
    %v142 = vadd.f32 %v53, %v141
    %v143 = vpop.f32.mrb[0].mxu0
    %144 = vdwg.mxu0
    %v145 = vmax.f32 %v132, 0.0
    %v146 = vmax.f32 %v137, 0.0
    %v147 = vmax.f32 %v142, 0.0
    %v148 = vld [vmem:[%s3] sm:$0xff]
    %v149 = vld [vmem:[%s3 + $0x8] sm:$0xff]
    %v150 = vld [vmem:[%s3 + $0x10] sm:$0xff]
    %v151 = vld [vmem:[%s3 + $0x18] sm:$0xff]
    %v152 = vld [vmem:[%s3 + $0x20] sm:$0xff]
    %v153 = vld [vmem:[%s3 + $0x28] sm:$0xff]
    %v154 = vld [vmem:[%s3 + $0x30] sm:$0xff]
    %v155 = vld [vmem:[%s3 + $0x38] sm:$0xff]
    %v156 = vld [vmem:[%s4] sm:$0x1]
    %v158 = vlaneseq
    %v159 = vshrl.u32 %v158, 7
    %v160 = vsub.s32 0, %v159
    %v161 = vrot.slane %v156, %v160
    %vm163 = vcmask 523264
    %v165 = vsel %vm163, %v145, 0
    %v168 = vsel %vm163, %v146, 0
    %v171 = vsel %vm163, %v147, 0
    %173 = vmatprep.subr.mxu0 0.0
    %174 = vmatpush1.msra.mxu0 %v148
    %175 = vmatprep.subr.mxu0 0.0
    %176 = vmatpush1.msra.mxu0 %v149
    %177 = vmatprep.subr.mxu0 0.0
    %178 = vmatpush1.msra.mxu0 %v150
    %179 = vmatprep.subr.mxu0 0.0
    %180 = vmatpush1.msra.mxu0 %v151
    %181 = vmatprep.subr.mxu0 0.0
    %182 = vmatpush1.msra.mxu0 %v152
    %183 = vmatprep.subr.mxu0 0.0
    %184 = vmatpush1.msra.mxu0 %v153
    %185 = vmatprep.subr.mxu0 0.0
    %186 = vmatpush1.msra.mxu0 %v154
    %187 = vmatprep.subr.mxu0 0.0
    %188 = vmatpush1.msra.mxu0 %v155
    %189 = vmatprep.subr.mxu0 0.0
    %190 = vmatpush1.msra.mxu0 0.0
    %191 = vmatprep.subr.mxu0 0.0
    %192 = vmatpush1.msra.mxu0 0.0
    %193 = vmatprep.subr.mxu0 0.0
    %194 = vmatpush1.msra.mxu0 0.0
    %195 = vmatprep.subr.mxu0 0.0
    %196 = vmatpush1.msra.mxu0 0.0
    %197 = vmatprep.subr.mxu0 0.0
    %198 = vmatpush1.msra.mxu0 0.0
    %199 = vmatprep.subr.mxu0 0.0
    %200 = vmatpush1.msra.mxu0 0.0
    %201 = vmatprep.subr.mxu0 0.0
    %202 = vmatpush1.msra.mxu0 0.0
    %203 = vmatprep.subr.mxu0 0.0
    %204 = vmatpush1.msra.mxu0 0.0
    %205 = vmatprep.subr.mxu0 0.0
    %206 = vmatpush1.msra.mxu0 0.0
    %207 = vmatprep.subr.mxu0 0.0
    %208 = vmatpush1.msra.mxu0 0.0
    %209 = vmatprep.subr.mxu0 0.0
    %210 = vmatpush1.msra.mxu0 0.0
    %211 = vmatprep.subr.mxu0 0.0
    %212 = vmatpush1.msra.mxu0 0.0
    %213 = vmatprep.subr.mxu0 0.0
    %214 = vmatpush1.msra.mxu0 0.0
    %215 = vmatprep.subr.mxu0 0.0
    %216 = vmatpush1.msra.mxu0 0.0
    %217 = vmatprep.subr.mxu0 0.0
    %218 = vmatpush1.msra.mxu0 0.0
    %219 = vmatprep.subr.mxu0 0.0
    %220 = vmatpush1.msra.mxu0 0.0
    %221 = vmatprep.subr.mxu0 0.0
    %222 = vmatpush1.msra.mxu0 0.0
    %223 = vmatprep.subr.mxu0 0.0
    %224 = vmatpush1.msra.mxu0 0.0
    %225 = vmatprep.subr.mxu0 0.0
    %226 = vmatpush1.msra.mxu0 0.0
    %227 = vmatprep.subr.mxu0 0.0
    %228 = vmatpush1.msra.mxu0 0.0
    %229 = vmatprep.subr.mxu0 0.0
    %230 = vmatpush1.msra.mxu0 0.0
    %231 = vmatprep.subr.mxu0 0.0
    %232 = vmatpush1.msra.mxu0 0.0
    %233 = vmatprep.subr.mxu0 0.0
    %234 = vmatpush1.msra.mxu0 0.0
    %235 = vmatprep.subr.mxu0 0.0
    %236 = vmatpush1.msra.mxu0 0.0
    %237 = vmatprep.mubr.f32.mxu0 0.0
    %238 = vmatmul.mubr.f32.gmra.mrb[0].mxu0 %v165
    %v239 = vpop.f32.mrb[0].mxu0
    %v240 = vadd.f32 %v161, %v239
    %v241 = vpop.f32.mrb[0].mxu0
    %242 = vmatprep.mubr.f32.mxu0 0.0
    %243 = vmatmul.mubr.f32.gmra.mrb[0].mxu0 %v168
    %v244 = vpop.f32.mrb[0].mxu0
    %v245 = vadd.f32 %v161, %v244
    %v246 = vpop.f32.mrb[0].mxu0
    %247 = vmatprep.mubr.f32.mxu0 0.0
    %248 = vmatmul.mubr.f32.gmra.mrb[0].mxu0 %v171
    %v249 = vpop.f32.mrb[0].mxu0
    %v250 = vadd.f32 %v161, %v249
    %v251 = vpop.f32.mrb[0].mxu0
    %252 = vdwg.mxu0
    %v253 = vmax.f32 %v240, 0.0
    %v254 = vmax.f32 %v245, 0.0
    %v255 = vmax.f32 %v250, 0.0
    %v256 = vld [vmem:[%s5] sm:$0xff]
    %v257 = vld [vmem:[%s5 + $0x8] sm:$0xff]
    %v258 = vld [vmem:[%s5 + $0x10] sm:$0xff]
    %v259 = vld [vmem:[%s5 + $0x18] sm:$0xff]
    %v260 = vld [vmem:[%s5 + $0x20] sm:$0xff]
    %v261 = vld [vmem:[%s5 + $0x28] sm:$0xff]
    %v262 = vld [vmem:[%s5 + $0x30] sm:$0xff]
    %v263 = vld [vmem:[%s5 + $0x38] sm:$0xff]
    %v264 = vld [vmem:[%s6] sm:$0x1]
    %v266 = vlaneseq
    %v267 = vshrl.u32 %v266, 7
    %v268 = vsub.s32 0, %v267
    %v269 = vrot.slane %v264, %v268
    %v272 = vsel %vm163, %v253, 0
    %v275 = vsel %vm163, %v254, 0
    %v278 = vsel %vm163, %v255, 0
    %280 = vmatprep.subr.mxu0 0.0
    %281 = vmatpush1.msra.mxu0 %v256
    %282 = vmatprep.subr.mxu0 0.0
    %283 = vmatpush1.msra.mxu0 %v257
    %284 = vmatprep.subr.mxu0 0.0
    %285 = vmatpush1.msra.mxu0 %v258
    %286 = vmatprep.subr.mxu0 0.0
    %287 = vmatpush1.msra.mxu0 %v259
    %288 = vmatprep.subr.mxu0 0.0
    %289 = vmatpush1.msra.mxu0 %v260
    %290 = vmatprep.subr.mxu0 0.0
    %291 = vmatpush1.msra.mxu0 %v261
    %292 = vmatprep.subr.mxu0 0.0
    %293 = vmatpush1.msra.mxu0 %v262
    %294 = vmatprep.subr.mxu0 0.0
    %295 = vmatpush1.msra.mxu0 %v263
    %296 = vmatprep.subr.mxu0 0.0
    %297 = vmatpush1.msra.mxu0 0.0
    %298 = vmatprep.subr.mxu0 0.0
    %299 = vmatpush1.msra.mxu0 0.0
    %300 = vmatprep.subr.mxu0 0.0
    %301 = vmatpush1.msra.mxu0 0.0
    %302 = vmatprep.subr.mxu0 0.0
    %303 = vmatpush1.msra.mxu0 0.0
    %304 = vmatprep.subr.mxu0 0.0
    %305 = vmatpush1.msra.mxu0 0.0
    %306 = vmatprep.subr.mxu0 0.0
    %307 = vmatpush1.msra.mxu0 0.0
    %308 = vmatprep.subr.mxu0 0.0
    %309 = vmatpush1.msra.mxu0 0.0
    %310 = vmatprep.subr.mxu0 0.0
    %311 = vmatpush1.msra.mxu0 0.0
    %312 = vmatprep.subr.mxu0 0.0
    %313 = vmatpush1.msra.mxu0 0.0
    %314 = vmatprep.subr.mxu0 0.0
    %315 = vmatpush1.msra.mxu0 0.0
    %316 = vmatprep.subr.mxu0 0.0
    %317 = vmatpush1.msra.mxu0 0.0
    %318 = vmatprep.subr.mxu0 0.0
    %319 = vmatpush1.msra.mxu0 0.0
    %320 = vmatprep.subr.mxu0 0.0
    %321 = vmatpush1.msra.mxu0 0.0
    %322 = vmatprep.subr.mxu0 0.0
    %323 = vmatpush1.msra.mxu0 0.0
    %324 = vmatprep.subr.mxu0 0.0
    %325 = vmatpush1.msra.mxu0 0.0
    %326 = vmatprep.subr.mxu0 0.0
    %327 = vmatpush1.msra.mxu0 0.0
    %328 = vmatprep.subr.mxu0 0.0
    %329 = vmatpush1.msra.mxu0 0.0
    %330 = vmatprep.subr.mxu0 0.0
    %331 = vmatpush1.msra.mxu0 0.0
    %332 = vmatprep.subr.mxu0 0.0
    %333 = vmatpush1.msra.mxu0 0.0
    %334 = vmatprep.subr.mxu0 0.0
    %335 = vmatpush1.msra.mxu0 0.0
    %336 = vmatprep.subr.mxu0 0.0
    %337 = vmatpush1.msra.mxu0 0.0
    %338 = vmatprep.subr.mxu0 0.0
    %339 = vmatpush1.msra.mxu0 0.0
    %340 = vmatprep.subr.mxu0 0.0
    %341 = vmatpush1.msra.mxu0 0.0
    %342 = vmatprep.subr.mxu0 0.0
    %343 = vmatpush1.msra.mxu0 0.0
    %344 = vmatprep.mubr.f32.mxu0 0.0
    %345 = vmatmul.mubr.f32.gmra.mrb[0].mxu0 %v272
    %v346 = vpop.f32.mrb[0].mxu0
    %v347 = vadd.f32 %v269, %v346
    %v348 = vpop.f32.mrb[0].mxu0
    %349 = vmatprep.mubr.f32.mxu0 0.0
    %350 = vmatmul.mubr.f32.gmra.mrb[0].mxu0 %v275
    %v351 = vpop.f32.mrb[0].mxu0
    %v352 = vadd.f32 %v269, %v351
    %v353 = vpop.f32.mrb[0].mxu0
    %354 = vmatprep.mubr.f32.mxu0 0.0
    %355 = vmatmul.mubr.f32.gmra.mrb[0].mxu0 %v278
    %v356 = vpop.f32.mrb[0].mxu0
    %v357 = vadd.f32 %v269, %v356
    %v358 = vpop.f32.mrb[0].mxu0
    %359 = vdwg.mxu0
    %v360 = vadd.f32 %v347, %v41
    %v361 = vadd.f32 %v352, %v42
    %v362 = vadd.f32 %v357, %v43
    %363 = vst.msk [vmem:[#allocation5] sm:$0xff] %vm55, %v360
    %364 = vst.msk [vmem:[#allocation5 + $0x8] sm:$0xff] %vm55, %v361
    %365 = vst.msk [vmem:[#allocation5 + $0x10] sm:$0xff] %vm55, %v362
    // Predicated region
    $region34: #{tpu_custom_call.1} parent=1 // pred_check
      _
    $region35: #{tpu_custom_call.1} parent=1 // pred_check_branch
      %367 = sbr.rel (0) target = $region37
    $region36: #{tpu_custom_call.1} parent=1 // pred_region
      %s369 = ssub.s32 384, 384
      %370 = vsyncadd [#allocation4], %s369
      %s371 = sshll.u32 [#allocation5], 4
      %s372 = int_to_ptr.vmem [resolvable:$true] %s371
      %377 = dma.vmem_to_hbm [thread:$0]  %s372, 384, %s7, [#allocation4], 128, 128, 8
    $region37: #{tpu_custom_call.1} parent=1 // pred_fallthru
      _
    // Predicated region
    $region38: #{tpu_custom_call.1} parent=1 // pred_check
      _
    $region39: #{tpu_custom_call.1} parent=1 // pred_check_branch
      %379 = sbr.rel (0) target = $region41
    $region40: #{tpu_custom_call.1} parent=1 // pred_region
      %380 = dma.done [#allocation4], 384
    $region41: #{tpu_custom_call.1} parent=1 // pred_fallthru
      _
    %381 = vsyncpa [#allocation3], 1
    %382 = vsyncpa [#allocation4], 1

</llo_original>
